<compile_context>
chip_gen: v5e
topology: v5e:2x2
jax: 0.10.0
libtpu: 0.0.40
codegen_flags: <defaults>
</compile_context>

<pallas_src>
import functools

import jax
import jax.numpy as jnp
from jax import lax
from jax.experimental import pallas as pl
from jax.experimental.pallas import tpu as pltpu


def _lstm_sentiment_kernel(x2_ref, lens_ref, wih2_ref, whh2_ref, bg_ref,
                           w12_ref, b12_ref, out_ref, xg_ref):
    TB, G8 = xg_ref.shape          # (T*BP, 8H)
    BP = out_ref.shape[0]          # padded batch (multiple of 8 sublanes)
    T = TB // BP
    G2 = G8 // 4                   # 2H (merged fwd|bwd hidden width)
    H = G2 // 2

    # ---- hoisted input projection (off the recurrent critical path) --------
    # One big bf16 matmul, f32 accumulate; bias folded in so the loop body has
    # no broadcast work.
    xg_ref[...] = (jnp.dot(x2_ref[...], wih2_ref[...],
                           preferred_element_type=jnp.float32)
                   + bg_ref[...])

    whh2 = whh2_ref[...]           # (2H, 8H) bf16 block-structured recurrent W

    # ---- per-row step thresholds, built once off the chain ------------------
    # Forward half (lanes < H): capture at s == len-1, always update.
    # Backward half:            capture at s == T-len, update when s >= T-len.
    lane = lax.broadcasted_iota(jnp.int32, (BP, G2), 1)
    fwd_half = lane < H
    len_b = jnp.broadcast_to(lens_ref[...], (BP, G2))          # (BP, 2H) int32
    cap_th = jnp.where(fwd_half, len_b - 1, T - len_b)
    upd_th = jnp.where(fwd_half, 0, T - len_b)

    zeros = jnp.zeros((BP, G2), jnp.float32)

    # Merged bidirectional recurrence. State h_both = [h_f | h_b] (BP, 2H).
    # At step s the forward half consumes x[s], the backward half x[T-1-s]
    # (already interleaved into the gate columns of xg by the wrapper).
    # Gate column layout: [i_f,i_b | f_f,f_b | o_f,o_b | g_f,g_b].
    def body(s, carry):
        h, c, out = carry
        r = pl.multiple_of(s * BP, BP)
        g = xg_ref[pl.ds(r, BP), :] + jnp.dot(
            h.astype(jnp.bfloat16), whh2,
            preferred_element_type=jnp.float32)                 # (BP, 8H) f32
        # sigmoid(x) = 0.5*tanh(0.5*x) + 0.5  -> one EUP push for i,f,o gates
        sig = 0.5 * jnp.tanh(0.5 * g[:, 0:3 * G2]) + 0.5
        g_c = jnp.tanh(g[:, 3 * G2:4 * G2])                     # g gate
        i_g = sig[:, 0:G2]
        f_g = sig[:, G2:2 * G2]
        o_g = sig[:, 2 * G2:3 * G2]
        c_new = f_g * c + i_g * g_c
        h_new = o_g * jnp.tanh(c_new)
        # Full-width (2H=64 lane < 1 vreg) selects: splitting out the always-
        # true forward half would not reduce vreg ops at this width.
        upd = s >= upd_th
        h = jnp.where(upd, h_new, h)
        c = jnp.where(upd, c_new, c)
        out = jnp.where(s == cap_th, h, out)
        return h, c, out

    _, _, feat = lax.fori_loop(0, T, body, (zeros, zeros, zeros), unroll=True)

    # ---- fused, lane-dense head ---------------------------------------------
    # feat is already [out_f | out_b]; fc1 and hidden2tag were fused in the
    # wrapper (w12 = w1 @ w2). Padded output lanes carry bias -1e30 so they
    # contribute nothing to the log_softmax over the real tagset lanes.
    # TODO(synk): nn.Dropout(0.5) is identity in eval mode; training-mode
    # stochastic masking is intentionally not reproduced here.
    z = jnp.dot(feat.astype(jnp.bfloat16), w12_ref[...],
                preferred_element_type=jnp.float32) + b12_ref[...]
    m = jnp.max(z, axis=1, keepdims=True)
    lse = m + jnp.log(jnp.sum(jnp.exp(z - m), axis=1, keepdims=True))
    out_ref[...] = z - lse                     # log_softmax, dim=1


def _full_spec(shape):
    nd = len(shape)
    return pl.BlockSpec(shape, lambda i, nd=nd: (0,) * nd)


def _interleave_gates(w, hidden_dim, direction):
    """(rows, 4H) in PyTorch gate order [i,f,g,o] -> (rows, 8H) with merged
    column layout [i_f,i_b,f_f,f_b,o_f,o_b,g_f,g_b]; the other direction's
    column slots are zero-filled."""
    H = hidden_dim
    i, f, g, o = w[:, 0:H], w[:, H:2 * H], w[:, 2 * H:3 * H], w[:, 3 * H:4 * H]
    z = jnp.zeros_like(i)
    blocks = []
    for blk in (i, f, o, g):
        blocks.extend([blk, z] if direction == 0 else [z, blk])
    return jnp.concatenate(blocks, axis=1)


def lstm_sentiment_forward(sentence, lengths, params):
    """sentence: (B, T) int32 token ids; lengths: (B,) int32 (all >= 1)."""
    emb = params["embedding"]                      # (vocab, E)
    B, T = sentence.shape
    E = emb.shape[1]
    H = params["whh_f"].shape[0]
    tagset = params["w2"].shape[1]
    BP = ((B + 7) // 8) * 8                        # pad batch to a sublane tile
    OUT_LANES = 128                                # lane-dense output slab

    embeds = jnp.take(emb, sentence, axis=0)       # (B, T, E)  -- glue gather
    x = jnp.transpose(embeds, (1, 0, 2)).astype(jnp.float32)   # (T, B, E)
    x = jnp.pad(x, ((0, 0), (0, BP - B), (0, 0)))
    lens = jnp.pad(lengths.astype(jnp.int32), (0, BP - B), constant_values=1)
    lens_col = lens.reshape(BP, 1)                 # (BP, 1) int32

    # Pair forward/backward timesteps: x2[s] = [x[s] | x[T-1-s]]  (T, BP, 2E);
    # cast the MXU operand to bf16 (accumulation stays f32 in-kernel).
    x2 = jnp.concatenate([x, x[::-1]], axis=-1)
    x2f = x2.reshape(T * BP, 2 * E).astype(jnp.bfloat16)

    # Merged weights: one input projection (2E, 8H), one block-structured
    # recurrent weight (2H, 8H), one bias (1, 8H). Gate columns permuted
    # consistently across W_ih, W_hh and biases. MXU operands in bf16.
    wih2 = jnp.concatenate([_interleave_gates(params["wih_f"], H, 0),
                            _interleave_gates(params["wih_b"], H, 1)],
                           axis=0).astype(jnp.bfloat16)
    whh2 = jnp.concatenate([_interleave_gates(params["whh_f"], H, 0),
                            _interleave_gates(params["whh_b"], H, 1)],
                           axis=0).astype(jnp.bfloat16)
    bg = (_interleave_gates(params["b_f"], H, 0)
          + _interleave_gates(params["b_b"], H, 1))             # f32 (1, 8H)

    # Fused head: fc1 then hidden2tag with no nonlinearity between (dropout is
    # identity in eval) -> single (2H, tagset) matmul, zero-padded to 128 lanes.
    # Padded-lane bias = -1e30 masks those lanes out of the log_softmax.
    w12 = params["w1"] @ params["w2"]                           # (2H, tagset)
    b12 = params["b1"] @ params["w2"] + params["b2"]            # (1, tagset)
    w12p = jnp.pad(w12, ((0, 0), (0, OUT_LANES - tagset))).astype(jnp.bfloat16)
    b12p = jnp.concatenate(
        [b12, jnp.full((1, OUT_LANES - tagset), -1e30, jnp.float32)], axis=1)

    inputs = (x2f, lens_col, wih2, whh2, bg, w12p, b12p)

    out_p = pl.pallas_call(
        _lstm_sentiment_kernel,
        out_shape=jax.ShapeDtypeStruct((BP, OUT_LANES), jnp.float32),
        grid=(1,),
        in_specs=[_full_spec(a.shape) for a in inputs],
        out_specs=_full_spec((BP, OUT_LANES)),
        scratch_shapes=[pltpu.VMEM((T * BP, 8 * H), jnp.float32)],
        compiler_params=pltpu.CompilerParams(
            dimension_semantics=("arbitrary",)),
    )(*inputs)
    return out_p[:B, :tagset]


def _reference_forward(sentence, lengths, params):
    """Pure-JAX f32 reference of the PyTorch eval-mode forward."""
    emb = params["embedding"]
    B, T = sentence.shape
    H = params["whh_f"].shape[0]
    x = jnp.take(emb, sentence, axis=0).astype(jnp.float32)     # (B, T, E)

    def cell(xt, h, c, wih, whh, b):
        g = xt @ wih + h @ whh + b                              # gates i,f,g,o
        i = jax.nn.sigmoid(g[:, 0:H])
        f = jax.nn.sigmoid(g[:, H:2 * H])
        gg = jnp.tanh(g[:, 2 * H:3 * H])
        o = jax.nn.sigmoid(g[:, 3 * H:4 * H])
        c = f * c + i * gg
        return o * jnp.tanh(c), c

    # forward direction: capture hidden at t = len-1
    h = c = jnp.zeros((B, H), jnp.float32)
    outs = []
    for t in range(T):
        h, c = cell(x[:, t], h, c, params["wih_f"], params["whh_f"],
                    params["b_f"])
        outs.append(h)
    outs = jnp.stack(outs, axis=1)                              # (B, T, H)
    idx = lengths.astype(jnp.int32) - 1
    out_f = outs[jnp.arange(B), idx]                            # (B, H)

    # backward direction (packed): at t = len-1 the backward hidden is exactly
    # one step from the zero state on x[:, len-1].
    x_last = x[jnp.arange(B), idx]                              # (B, E)
    hb, _ = cell(x_last, jnp.zeros((B, H), jnp.float32),
                 jnp.zeros((B, H), jnp.float32),
                 params["wih_b"], params["whh_b"], params["b_b"])

    feat = jnp.concatenate([out_f, hb], axis=1)                 # (B, 2H)
    z = feat @ params["w1"] + params["b1"]
    z = z @ params["w2"] + params["b2"]
    return jax.nn.log_softmax(z, axis=1)


def init_params(key, vocab_size, embedding_dim, hidden_dim, tagset_size):
    E, H = embedding_dim, hidden_dim
    ks = jax.random.split(key, 12)
    u = lambda k, shape, s: jax.random.uniform(k, shape, jnp.float32, -s, s)
    inv = 1.0 / jnp.sqrt(H)
    return {
        "embedding": jax.random.normal(ks[0], (vocab_size, E), jnp.float32) * 0.1,
        # PyTorch stores W_ih as (4H, E), W_hh as (4H, H); pre-transposed here,
        # gate order i,f,g,o (permutation to kernel layout happens in wrapper).
        "wih_f": u(ks[1], (E, 4 * H), inv),
        "whh_f": u(ks[2], (H, 4 * H), inv),
        "b_f":   u(ks[3], (1, 4 * H), inv) + u(ks[4], (1, 4 * H), inv),  # b_ih+b_hh
        "wih_b": u(ks[5], (E, 4 * H), inv),
        "whh_b": u(ks[6], (H, 4 * H), inv),
        "b_b":   u(ks[7], (1, 4 * H), inv) + u(ks[8], (1, 4 * H), inv),
        # fc1: Linear(2H, 64); hidden2tag: Linear(64, tagset)
        "w1": u(ks[9], (2 * H, 64), 1.0 / jnp.sqrt(2 * H)),
        "b1": jnp.zeros((1, 64), jnp.float32),
        "w2": u(ks[10], (64, tagset_size), 1.0 / jnp.sqrt(64.0)),
        "b2": jnp.zeros((1, tagset_size), jnp.float32),
    }


if __name__ == "__main__":
    B, T = 2, 8            # T = MAX_LEN + 1
    E, H = 32, 32          # embedding_dim, hidden_dim
    vocab, tagset = 50, 5

    key = jax.random.PRNGKey(0)
    k_tok, k_par = jax.random.split(key)

    params = init_params(k_par, vocab, E, H, tagset)
    sentence = jax.random.randint(k_tok, (B, T), 0, vocab, dtype=jnp.int32)
    lengths = jnp.array([8, 5], dtype=jnp.int32)   # sorted desc, as pack_padded expects

    fwd = jax.jit(functools.partial(lstm_sentiment_forward, params=params))
    out = fwd(sentence, lengths)
    jax.block_until_ready(out)

    ref = _reference_forward(sentence, lengths, params)

    assert out.shape == (B, tagset)
    assert bool(jnp.all(jnp.isfinite(out)))
    # log_softmax rows must sum (in prob space) to 1
    assert bool(jnp.allclose(jnp.sum(jnp.exp(out), axis=1), 1.0, atol=1e-5))
    # bf16 MXU operands with f32 accumulation -> relaxed tolerance vs f32 ref
    assert bool(jnp.allclose(out, ref, atol=5e-2)), (out, ref)
    print("KERNEL_OK")
</pallas_src>

<mosaic_0001>
module attributes {stable_mosaic.version = 11 : i64} {
  func.func @_lstm_sentiment_kernel(%arg0: i32, %arg1: memref<64x64xbf16, #tpu.memory_space<vmem>>, %arg2: memref<8x1xi32, #tpu.memory_space<vmem>>, %arg3: memref<64x256xbf16, #tpu.memory_space<vmem>>, %arg4: memref<64x256xbf16, #tpu.memory_space<vmem>>, %arg5: memref<1x256xf32, #tpu.memory_space<vmem>>, %arg6: memref<64x128xbf16, #tpu.memory_space<vmem>>, %arg7: memref<1x128xf32, #tpu.memory_space<vmem>>, %arg8: memref<8x128xf32, #tpu.memory_space<vmem>>, %arg9: memref<64x256xf32, #tpu.memory_space<vmem>>) attributes {dimension_semantics = [#tpu.dimension_semantics<arbitrary>], iteration_bounds = array<i64: 1>, scalar_prefetch = 0 : i64, scratch_operands = 1 : i64, tpu.core_type = #tpu.core_type<tc>, window_params = [{pipeline_mode = #tpu.pipeline_mode<synchronous>, transform_indices = @transform_0, window_bounds = array<i64: 64, 64>}, {pipeline_mode = #tpu.pipeline_mode<synchronous>, transform_indices = @transform_1, window_bounds = array<i64: 8, 1>}, {pipeline_mode = #tpu.pipeline_mode<synchronous>, transform_indices = @transform_2, window_bounds = array<i64: 64, 256>}, {pipeline_mode = #tpu.pipeline_mode<synchronous>, transform_indices = @transform_3, window_bounds = array<i64: 64, 256>}, {pipeline_mode = #tpu.pipeline_mode<synchronous>, transform_indices = @transform_4, window_bounds = array<i64: 1, 256>}, {pipeline_mode = #tpu.pipeline_mode<synchronous>, transform_indices = @transform_5, window_bounds = array<i64: 64, 128>}, {pipeline_mode = #tpu.pipeline_mode<synchronous>, transform_indices = @transform_6, window_bounds = array<i64: 1, 128>}, {pipeline_mode = #tpu.pipeline_mode<synchronous>, transform_indices = @transform_7, window_bounds = array<i64: 8, 128>}]} {
    %c0 = arith.constant 0 : index
    %c0_0 = arith.constant 0 : index
    %0 = vector.load %arg1[%c0, %c0_0] : memref<64x64xbf16, #tpu.memory_space<vmem>>, vector<64x64xbf16>
    %c0_1 = arith.constant 0 : index
    %c0_2 = arith.constant 0 : index
    %1 = vector.load %arg3[%c0_1, %c0_2] : memref<64x256xbf16, #tpu.memory_space<vmem>>, vector<64x256xbf16>
    %cst = arith.constant dense<0.000000e+00> : vector<64x256xf32>
    %2 = tpu.matmul %0, %1, %cst {dimension_numbers = #tpu.dot_dimension_numbers<[1], [0], [0], [1], [0, 0, 1, 1], [], []>} : vector<64x64xbf16>, vector<64x256xbf16>, vector<64x256xf32> -> vector<64x256xf32>
    %c0_3 = arith.constant 0 : index
    %c0_4 = arith.constant 0 : index
    %3 = vector.load %arg5[%c0_3, %c0_4] : memref<1x256xf32, #tpu.memory_space<vmem>>, vector<1x256xf32>
    %4 = vector.broadcast %3 : vector<1x256xf32> to vector<64x256xf32>
    %5 = arith.addf %2, %4 : vector<64x256xf32>
    %c0_5 = arith.constant 0 : index
    %c0_6 = arith.constant 0 : index
    %6 = vector.load %arg9[%c0_5, %c0_6] : memref<64x256xf32, #tpu.memory_space<vmem>>, vector<64x256xf32>
    tpu.vector_store %arg9[%c0_5, %c0_6], %5 {strides = array<i32>} : memref<64x256xf32, #tpu.memory_space<vmem>>, vector<64x256xf32>,
    %c0_7 = arith.constant 0 : index
    %c0_8 = arith.constant 0 : index
    %7 = vector.load %arg4[%c0_7, %c0_8] : memref<64x256xbf16, #tpu.memory_space<vmem>>, vector<64x256xbf16>
    %8 = tpu.iota {dimensions = array<i32: 1>} : vector<8x64xi32>
    %c32_i32 = arith.constant 32 : i32
    %9 = vector.broadcast %c32_i32 : i32 to vector<8x64xi32>
    %10 = arith.cmpi slt, %8, %9 : vector<8x64xi32>
    %c0_9 = arith.constant 0 : index
    %c0_10 = arith.constant 0 : index
    %11 = vector.load %arg2[%c0_9, %c0_10] : memref<8x1xi32, #tpu.memory_space<vmem>>, vector<8x1xi32>
    %12 = vector.shape_cast %11 : vector<8x1xi32> to vector<8x1xi32>
    %13 = vector.broadcast %12 : vector<8x1xi32> to vector<8x64xi32>
    %c1_i32 = arith.constant 1 : i32
    %14 = vector.broadcast %c1_i32 : i32 to vector<8x64xi32>
    %15 = arith.subi %13, %14 : vector<8x64xi32>
    %c8_i32 = arith.constant 8 : i32
    %16 = vector.broadcast %c8_i32 : i32 to vector<8x64xi32>
    %17 = arith.subi %16, %13 : vector<8x64xi32>
    %18 = arith.select %10, %15, %17 : vector<8x64xi1>, vector<8x64xi32>
    %c8_i32_11 = arith.constant 8 : i32
    %19 = vector.broadcast %c8_i32_11 : i32 to vector<8x64xi32>
    %20 = arith.subi %19, %13 : vector<8x64xi32>
    %c0_i32 = arith.constant 0 : i32
    %21 = vector.broadcast %c0_i32 : i32 to vector<8x64xi32>
    %22 = arith.select %10, %21, %20 : vector<8x64xi1>, vector<8x64xi32>
    %cst_12 = arith.constant 0.000000e+00 : f32
    %23 = vector.broadcast %cst_12 : f32 to vector<8x64xf32>
    %c0_i32_13 = arith.constant 0 : i32
    %c8_i32_14 = arith.constant 8 : i32
    %24 = arith.muli %c0_i32_13, %c8_i32_14 : i32
    %25 = tpu.assume_multiple %24, 8 : i32
    %26 = arith.index_cast %25 : i32 to index
    %c0_15 = arith.constant 0 : index
    %27 = vector.load %arg9[%26, %c0_15] : memref<64x256xf32, #tpu.memory_space<vmem>>, vector<8x256xf32>
    %28 = arith.truncf %23 : vector<8x64xf32> to vector<8x64xbf16>
    %cst_16 = arith.constant dense<0.000000e+00> : vector<8x256xf32>
    %29 = tpu.matmul %28, %7, %cst_16 {dimension_numbers = #tpu.dot_dimension_numbers<[1], [0], [0], [1], [0, 0, 1, 1], [], []>} : vector<8x64xbf16>, vector<64x256xbf16>, vector<8x256xf32> -> vector<8x256xf32>
    %30 = arith.addf %27, %29 : vector<8x256xf32>
    %31 = vector.extract_strided_slice %30 {offsets = [0, 0], sizes = [8, 192], strides = [1, 1]} : vector<8x256xf32> to vector<8x192xf32>
    %cst_17 = arith.constant 5.000000e-01 : f32
    %32 = vector.broadcast %cst_17 : f32 to vector<8x192xf32>
    %33 = arith.mulf %32, %31 : vector<8x192xf32>
    %34 = math.tanh %33 : vector<8x192xf32>
    %cst_18 = arith.constant 5.000000e-01 : f32
    %35 = vector.broadcast %cst_18 : f32 to vector<8x192xf32>
    %36 = arith.mulf %35, %34 : vector<8x192xf32>
    %cst_19 = arith.constant 5.000000e-01 : f32
    %37 = vector.broadcast %cst_19 : f32 to vector<8x192xf32>
    %38 = arith.addf %36, %37 : vector<8x192xf32>
    %39 = vector.extract_strided_slice %30 {offsets = [0, 192], sizes = [8, 64], strides = [1, 1]} : vector<8x256xf32> to vector<8x64xf32>
    %40 = math.tanh %39 : vector<8x64xf32>
    %41 = vector.extract_strided_slice %38 {offsets = [0, 0], sizes = [8, 64], strides = [1, 1]} : vector<8x192xf32> to vector<8x64xf32>
    %42 = vector.extract_strided_slice %38 {offsets = [0, 64], sizes = [8, 64], strides = [1, 1]} : vector<8x192xf32> to vector<8x64xf32>
    %43 = vector.extract_strided_slice %38 {offsets = [0, 128], sizes = [8, 64], strides = [1, 1]} : vector<8x192xf32> to vector<8x64xf32>
    %44 = arith.mulf %42, %23 : vector<8x64xf32>
    %45 = arith.mulf %41, %40 : vector<8x64xf32>
    %46 = arith.addf %44, %45 : vector<8x64xf32>
    %47 = math.tanh %46 : vector<8x64xf32>
    %48 = arith.mulf %43, %47 : vector<8x64xf32>
    %49 = vector.broadcast %c0_i32_13 : i32 to vector<8x64xi32>
    %50 = arith.cmpi sge, %49, %22 : vector<8x64xi32>
    %51 = arith.select %50, %48, %23 : vector<8x64xi1>, vector<8x64xf32>
    %52 = arith.select %50, %46, %23 : vector<8x64xi1>, vector<8x64xf32>
    %53 = vector.broadcast %c0_i32_13 : i32 to vector<8x64xi32>
    %54 = arith.cmpi eq, %53, %18 : vector<8x64xi32>
    %55 = arith.select %54, %51, %23 : vector<8x64xi1>, vector<8x64xf32>
    %c1_i32_20 = arith.constant 1 : i32
    %c8_i32_21 = arith.constant 8 : i32
    %56 = arith.muli %c1_i32_20, %c8_i32_21 : i32
    %57 = tpu.assume_multiple %56, 8 : i32
    %58 = arith.index_cast %57 : i32 to index
    %c0_22 = arith.constant 0 : index
    %59 = vector.load %arg9[%58, %c0_22] : memref<64x256xf32, #tpu.memory_space<vmem>>, vector<8x256xf32>
    %60 = arith.truncf %51 : vector<8x64xf32> to vector<8x64xbf16>
    %cst_23 = arith.constant dense<0.000000e+00> : vector<8x256xf32>
    %61 = tpu.matmul %60, %7, %cst_23 {dimension_numbers = #tpu.dot_dimension_numbers<[1], [0], [0], [1], [0, 0, 1, 1], [], []>} : vector<8x64xbf16>, vector<64x256xbf16>, vector<8x256xf32> -> vector<8x256xf32>
    %62 = arith.addf %59, %61 : vector<8x256xf32>
    %63 = vector.extract_strided_slice %62 {offsets = [0, 0], sizes = [8, 192], strides = [1, 1]} : vector<8x256xf32> to vector<8x192xf32>
    %cst_24 = arith.constant 5.000000e-01 : f32
    %64 = vector.broadcast %cst_24 : f32 to vector<8x192xf32>
    %65 = arith.mulf %64, %63 : vector<8x192xf32>
    %66 = math.tanh %65 : vector<8x192xf32>
    %cst_25 = arith.constant 5.000000e-01 : f32
    %67 = vector.broadcast %cst_25 : f32 to vector<8x192xf32>
    %68 = arith.mulf %67, %66 : vector<8x192xf32>
    %cst_26 = arith.constant 5.000000e-01 : f32
    %69 = vector.broadcast %cst_26 : f32 to vector<8x192xf32>
    %70 = arith.addf %68, %69 : vector<8x192xf32>
    %71 = vector.extract_strided_slice %62 {offsets = [0, 192], sizes = [8, 64], strides = [1, 1]} : vector<8x256xf32> to vector<8x64xf32>
    %72 = math.tanh %71 : vector<8x64xf32>
    %73 = vector.extract_strided_slice %70 {offsets = [0, 0], sizes = [8, 64], strides = [1, 1]} : vector<8x192xf32> to vector<8x64xf32>
    %74 = vector.extract_strided_slice %70 {offsets = [0, 64], sizes = [8, 64], strides = [1, 1]} : vector<8x192xf32> to vector<8x64xf32>
    %75 = vector.extract_strided_slice %70 {offsets = [0, 128], sizes = [8, 64], strides = [1, 1]} : vector<8x192xf32> to vector<8x64xf32>
    %76 = arith.mulf %74, %52 : vector<8x64xf32>
    %77 = arith.mulf %73, %72 : vector<8x64xf32>
    %78 = arith.addf %76, %77 : vector<8x64xf32>
    %79 = math.tanh %78 : vector<8x64xf32>
    %80 = arith.mulf %75, %79 : vector<8x64xf32>
    %81 = vector.broadcast %c1_i32_20 : i32 to vector<8x64xi32>
    %82 = arith.cmpi sge, %81, %22 : vector<8x64xi32>
    %83 = arith.select %82, %80, %51 : vector<8x64xi1>, vector<8x64xf32>
    %84 = arith.select %82, %78, %52 : vector<8x64xi1>, vector<8x64xf32>
    %85 = vector.broadcast %c1_i32_20 : i32 to vector<8x64xi32>
    %86 = arith.cmpi eq, %85, %18 : vector<8x64xi32>
    %87 = arith.select %86, %83, %55 : vector<8x64xi1>, vector<8x64xf32>
    %c2_i32 = arith.constant 2 : i32
    %c8_i32_27 = arith.constant 8 : i32
    %88 = arith.muli %c2_i32, %c8_i32_27 : i32
    %89 = tpu.assume_multiple %88, 8 : i32
    %90 = arith.index_cast %89 : i32 to index
    %c0_28 = arith.constant 0 : index
    %91 = vector.load %arg9[%90, %c0_28] : memref<64x256xf32, #tpu.memory_space<vmem>>, vector<8x256xf32>
    %92 = arith.truncf %83 : vector<8x64xf32> to vector<8x64xbf16>
    %cst_29 = arith.constant dense<0.000000e+00> : vector<8x256xf32>
    %93 = tpu.matmul %92, %7, %cst_29 {dimension_numbers = #tpu.dot_dimension_numbers<[1], [0], [0], [1], [0, 0, 1, 1], [], []>} : vector<8x64xbf16>, vector<64x256xbf16>, vector<8x256xf32> -> vector<8x256xf32>
    %94 = arith.addf %91, %93 : vector<8x256xf32>
    %95 = vector.extract_strided_slice %94 {offsets = [0, 0], sizes = [8, 192], strides = [1, 1]} : vector<8x256xf32> to vector<8x192xf32>
    %cst_30 = arith.constant 5.000000e-01 : f32
    %96 = vector.broadcast %cst_30 : f32 to vector<8x192xf32>
    %97 = arith.mulf %96, %95 : vector<8x192xf32>
    %98 = math.tanh %97 : vector<8x192xf32>
    %cst_31 = arith.constant 5.000000e-01 : f32
    %99 = vector.broadcast %cst_31 : f32 to vector<8x192xf32>
    %100 = arith.mulf %99, %98 : vector<8x192xf32>
    %cst_32 = arith.constant 5.000000e-01 : f32
    %101 = vector.broadcast %cst_32 : f32 to vector<8x192xf32>
    %102 = arith.addf %100, %101 : vector<8x192xf32>
    %103 = vector.extract_strided_slice %94 {offsets = [0, 192], sizes = [8, 64], strides = [1, 1]} : vector<8x256xf32> to vector<8x64xf32>
    %104 = math.tanh %103 : vector<8x64xf32>
    %105 = vector.extract_strided_slice %102 {offsets = [0, 0], sizes = [8, 64], strides = [1, 1]} : vector<8x192xf32> to vector<8x64xf32>
    %106 = vector.extract_strided_slice %102 {offsets = [0, 64], sizes = [8, 64], strides = [1, 1]} : vector<8x192xf32> to vector<8x64xf32>
    %107 = vector.extract_strided_slice %102 {offsets = [0, 128], sizes = [8, 64], strides = [1, 1]} : vector<8x192xf32> to vector<8x64xf32>
    %108 = arith.mulf %106, %84 : vector<8x64xf32>
    %109 = arith.mulf %105, %104 : vector<8x64xf32>
    %110 = arith.addf %108, %109 : vector<8x64xf32>
    %111 = math.tanh %110 : vector<8x64xf32>
    %112 = arith.mulf %107, %111 : vector<8x64xf32>
    %113 = vector.broadcast %c2_i32 : i32 to vector<8x64xi32>
    %114 = arith.cmpi sge, %113, %22 : vector<8x64xi32>
    %115 = arith.select %114, %112, %83 : vector<8x64xi1>, vector<8x64xf32>
    %116 = arith.select %114, %110, %84 : vector<8x64xi1>, vector<8x64xf32>
    %117 = vector.broadcast %c2_i32 : i32 to vector<8x64xi32>
    %118 = arith.cmpi eq, %117, %18 : vector<8x64xi32>
    %119 = arith.select %118, %115, %87 : vector<8x64xi1>, vector<8x64xf32>
    %c3_i32 = arith.constant 3 : i32
    %c8_i32_33 = arith.constant 8 : i32
    %120 = arith.muli %c3_i32, %c8_i32_33 : i32
    %121 = tpu.assume_multiple %120, 8 : i32
    %122 = arith.index_cast %121 : i32 to index
    %c0_34 = arith.constant 0 : index
    %123 = vector.load %arg9[%122, %c0_34] : memref<64x256xf32, #tpu.memory_space<vmem>>, vector<8x256xf32>
    %124 = arith.truncf %115 : vector<8x64xf32> to vector<8x64xbf16>
    %cst_35 = arith.constant dense<0.000000e+00> : vector<8x256xf32>
    %125 = tpu.matmul %124, %7, %cst_35 {dimension_numbers = #tpu.dot_dimension_numbers<[1], [0], [0], [1], [0, 0, 1, 1], [], []>} : vector<8x64xbf16>, vector<64x256xbf16>, vector<8x256xf32> -> vector<8x256xf32>
    %126 = arith.addf %123, %125 : vector<8x256xf32>
    %127 = vector.extract_strided_slice %126 {offsets = [0, 0], sizes = [8, 192], strides = [1, 1]} : vector<8x256xf32> to vector<8x192xf32>
    %cst_36 = arith.constant 5.000000e-01 : f32
    %128 = vector.broadcast %cst_36 : f32 to vector<8x192xf32>
    %129 = arith.mulf %128, %127 : vector<8x192xf32>
    %130 = math.tanh %129 : vector<8x192xf32>
    %cst_37 = arith.constant 5.000000e-01 : f32
    %131 = vector.broadcast %cst_37 : f32 to vector<8x192xf32>
    %132 = arith.mulf %131, %130 : vector<8x192xf32>
    %cst_38 = arith.constant 5.000000e-01 : f32
    %133 = vector.broadcast %cst_38 : f32 to vector<8x192xf32>
    %134 = arith.addf %132, %133 : vector<8x192xf32>
    %135 = vector.extract_strided_slice %126 {offsets = [0, 192], sizes = [8, 64], strides = [1, 1]} : vector<8x256xf32> to vector<8x64xf32>
    %136 = math.tanh %135 : vector<8x64xf32>
    %137 = vector.extract_strided_slice %134 {offsets = [0, 0], sizes = [8, 64], strides = [1, 1]} : vector<8x192xf32> to vector<8x64xf32>
    %138 = vector.extract_strided_slice %134 {offsets = [0, 64], sizes = [8, 64], strides = [1, 1]} : vector<8x192xf32> to vector<8x64xf32>
    %139 = vector.extract_strided_slice %134 {offsets = [0, 128], sizes = [8, 64], strides = [1, 1]} : vector<8x192xf32> to vector<8x64xf32>
    %140 = arith.mulf %138, %116 : vector<8x64xf32>
    %141 = arith.mulf %137, %136 : vector<8x64xf32>
    %142 = arith.addf %140, %141 : vector<8x64xf32>
    %143 = math.tanh %142 : vector<8x64xf32>
    %144 = arith.mulf %139, %143 : vector<8x64xf32>
    %145 = vector.broadcast %c3_i32 : i32 to vector<8x64xi32>
    %146 = arith.cmpi sge, %145, %22 : vector<8x64xi32>
    %147 = arith.select %146, %144, %115 : vector<8x64xi1>, vector<8x64xf32>
    %148 = arith.select %146, %142, %116 : vector<8x64xi1>, vector<8x64xf32>
    %149 = vector.broadcast %c3_i32 : i32 to vector<8x64xi32>
    %150 = arith.cmpi eq, %149, %18 : vector<8x64xi32>
    %151 = arith.select %150, %147, %119 : vector<8x64xi1>, vector<8x64xf32>
    %c4_i32 = arith.constant 4 : i32
    %c8_i32_39 = arith.constant 8 : i32
    %152 = arith.muli %c4_i32, %c8_i32_39 : i32
    %153 = tpu.assume_multiple %152, 8 : i32
    %154 = arith.index_cast %153 : i32 to index
    %c0_40 = arith.constant 0 : index
    %155 = vector.load %arg9[%154, %c0_40] : memref<64x256xf32, #tpu.memory_space<vmem>>, vector<8x256xf32>
    %156 = arith.truncf %147 : vector<8x64xf32> to vector<8x64xbf16>
    %cst_41 = arith.constant dense<0.000000e+00> : vector<8x256xf32>
    %157 = tpu.matmul %156, %7, %cst_41 {dimension_numbers = #tpu.dot_dimension_numbers<[1], [0], [0], [1], [0, 0, 1, 1], [], []>} : vector<8x64xbf16>, vector<64x256xbf16>, vector<8x256xf32> -> vector<8x256xf32>
    %158 = arith.addf %155, %157 : vector<8x256xf32>
    %159 = vector.extract_strided_slice %158 {offsets = [0, 0], sizes = [8, 192], strides = [1, 1]} : vector<8x256xf32> to vector<8x192xf32>
    %cst_42 = arith.constant 5.000000e-01 : f32
    %160 = vector.broadcast %cst_42 : f32 to vector<8x192xf32>
    %161 = arith.mulf %160, %159 : vector<8x192xf32>
    %162 = math.tanh %161 : vector<8x192xf32>
    %cst_43 = arith.constant 5.000000e-01 : f32
    %163 = vector.broadcast %cst_43 : f32 to vector<8x192xf32>
    %164 = arith.mulf %163, %162 : vector<8x192xf32>
    %cst_44 = arith.constant 5.000000e-01 : f32
    %165 = vector.broadcast %cst_44 : f32 to vector<8x192xf32>
    %166 = arith.addf %164, %165 : vector<8x192xf32>
    %167 = vector.extract_strided_slice %158 {offsets = [0, 192], sizes = [8, 64], strides = [1, 1]} : vector<8x256xf32> to vector<8x64xf32>
    %168 = math.tanh %167 : vector<8x64xf32>
    %169 = vector.extract_strided_slice %166 {offsets = [0, 0], sizes = [8, 64], strides = [1, 1]} : vector<8x192xf32> to vector<8x64xf32>
    %170 = vector.extract_strided_slice %166 {offsets = [0, 64], sizes = [8, 64], strides = [1, 1]} : vector<8x192xf32> to vector<8x64xf32>
    %171 = vector.extract_strided_slice %166 {offsets = [0, 128], sizes = [8, 64], strides = [1, 1]} : vector<8x192xf32> to vector<8x64xf32>
    %172 = arith.mulf %170, %148 : vector<8x64xf32>
    %173 = arith.mulf %169, %168 : vector<8x64xf32>
    %174 = arith.addf %172, %173 : vector<8x64xf32>
    %175 = math.tanh %174 : vector<8x64xf32>
    %176 = arith.mulf %171, %175 : vector<8x64xf32>
    %177 = vector.broadcast %c4_i32 : i32 to vector<8x64xi32>
    %178 = arith.cmpi sge, %177, %22 : vector<8x64xi32>
    %179 = arith.select %178, %176, %147 : vector<8x64xi1>, vector<8x64xf32>
    %180 = arith.select %178, %174, %148 : vector<8x64xi1>, vector<8x64xf32>
    %181 = vector.broadcast %c4_i32 : i32 to vector<8x64xi32>
    %182 = arith.cmpi eq, %181, %18 : vector<8x64xi32>
    %183 = arith.select %182, %179, %151 : vector<8x64xi1>, vector<8x64xf32>
    %c5_i32 = arith.constant 5 : i32
    %c8_i32_45 = arith.constant 8 : i32
    %184 = arith.muli %c5_i32, %c8_i32_45 : i32
    %185 = tpu.assume_multiple %184, 8 : i32
    %186 = arith.index_cast %185 : i32 to index
    %c0_46 = arith.constant 0 : index
    %187 = vector.load %arg9[%186, %c0_46] : memref<64x256xf32, #tpu.memory_space<vmem>>, vector<8x256xf32>
    %188 = arith.truncf %179 : vector<8x64xf32> to vector<8x64xbf16>
    %cst_47 = arith.constant dense<0.000000e+00> : vector<8x256xf32>
    %189 = tpu.matmul %188, %7, %cst_47 {dimension_numbers = #tpu.dot_dimension_numbers<[1], [0], [0], [1], [0, 0, 1, 1], [], []>} : vector<8x64xbf16>, vector<64x256xbf16>, vector<8x256xf32> -> vector<8x256xf32>
    %190 = arith.addf %187, %189 : vector<8x256xf32>
    %191 = vector.extract_strided_slice %190 {offsets = [0, 0], sizes = [8, 192], strides = [1, 1]} : vector<8x256xf32> to vector<8x192xf32>
    %cst_48 = arith.constant 5.000000e-01 : f32
    %192 = vector.broadcast %cst_48 : f32 to vector<8x192xf32>
    %193 = arith.mulf %192, %191 : vector<8x192xf32>
    %194 = math.tanh %193 : vector<8x192xf32>
    %cst_49 = arith.constant 5.000000e-01 : f32
    %195 = vector.broadcast %cst_49 : f32 to vector<8x192xf32>
    %196 = arith.mulf %195, %194 : vector<8x192xf32>
    %cst_50 = arith.constant 5.000000e-01 : f32
    %197 = vector.broadcast %cst_50 : f32 to vector<8x192xf32>
    %198 = arith.addf %196, %197 : vector<8x192xf32>
    %199 = vector.extract_strided_slice %190 {offsets = [0, 192], sizes = [8, 64], strides = [1, 1]} : vector<8x256xf32> to vector<8x64xf32>
    %200 = math.tanh %199 : vector<8x64xf32>
    %201 = vector.extract_strided_slice %198 {offsets = [0, 0], sizes = [8, 64], strides = [1, 1]} : vector<8x192xf32> to vector<8x64xf32>
    %202 = vector.extract_strided_slice %198 {offsets = [0, 64], sizes = [8, 64], strides = [1, 1]} : vector<8x192xf32> to vector<8x64xf32>
    %203 = vector.extract_strided_slice %198 {offsets = [0, 128], sizes = [8, 64], strides = [1, 1]} : vector<8x192xf32> to vector<8x64xf32>
    %204 = arith.mulf %202, %180 : vector<8x64xf32>
    %205 = arith.mulf %201, %200 : vector<8x64xf32>
    %206 = arith.addf %204, %205 : vector<8x64xf32>
    %207 = math.tanh %206 : vector<8x64xf32>
    %208 = arith.mulf %203, %207 : vector<8x64xf32>
    %209 = vector.broadcast %c5_i32 : i32 to vector<8x64xi32>
    %210 = arith.cmpi sge, %209, %22 : vector<8x64xi32>
    %211 = arith.select %210, %208, %179 : vector<8x64xi1>, vector<8x64xf32>
    %212 = arith.select %210, %206, %180 : vector<8x64xi1>, vector<8x64xf32>
    %213 = vector.broadcast %c5_i32 : i32 to vector<8x64xi32>
    %214 = arith.cmpi eq, %213, %18 : vector<8x64xi32>
    %215 = arith.select %214, %211, %183 : vector<8x64xi1>, vector<8x64xf32>
    %c6_i32 = arith.constant 6 : i32
    %c8_i32_51 = arith.constant 8 : i32
    %216 = arith.muli %c6_i32, %c8_i32_51 : i32
    %217 = tpu.assume_multiple %216, 8 : i32
    %218 = arith.index_cast %217 : i32 to index
    %c0_52 = arith.constant 0 : index
    %219 = vector.load %arg9[%218, %c0_52] : memref<64x256xf32, #tpu.memory_space<vmem>>, vector<8x256xf32>
    %220 = arith.truncf %211 : vector<8x64xf32> to vector<8x64xbf16>
    %cst_53 = arith.constant dense<0.000000e+00> : vector<8x256xf32>
    %221 = tpu.matmul %220, %7, %cst_53 {dimension_numbers = #tpu.dot_dimension_numbers<[1], [0], [0], [1], [0, 0, 1, 1], [], []>} : vector<8x64xbf16>, vector<64x256xbf16>, vector<8x256xf32> -> vector<8x256xf32>
    %222 = arith.addf %219, %221 : vector<8x256xf32>
    %223 = vector.extract_strided_slice %222 {offsets = [0, 0], sizes = [8, 192], strides = [1, 1]} : vector<8x256xf32> to vector<8x192xf32>
    %cst_54 = arith.constant 5.000000e-01 : f32
    %224 = vector.broadcast %cst_54 : f32 to vector<8x192xf32>
    %225 = arith.mulf %224, %223 : vector<8x192xf32>
    %226 = math.tanh %225 : vector<8x192xf32>
    %cst_55 = arith.constant 5.000000e-01 : f32
    %227 = vector.broadcast %cst_55 : f32 to vector<8x192xf32>
    %228 = arith.mulf %227, %226 : vector<8x192xf32>
    %cst_56 = arith.constant 5.000000e-01 : f32
    %229 = vector.broadcast %cst_56 : f32 to vector<8x192xf32>
    %230 = arith.addf %228, %229 : vector<8x192xf32>
    %231 = vector.extract_strided_slice %222 {offsets = [0, 192], sizes = [8, 64], strides = [1, 1]} : vector<8x256xf32> to vector<8x64xf32>
    %232 = math.tanh %231 : vector<8x64xf32>
    %233 = vector.extract_strided_slice %230 {offsets = [0, 0], sizes = [8, 64], strides = [1, 1]} : vector<8x192xf32> to vector<8x64xf32>
    %234 = vector.extract_strided_slice %230 {offsets = [0, 64], sizes = [8, 64], strides = [1, 1]} : vector<8x192xf32> to vector<8x64xf32>
    %235 = vector.extract_strided_slice %230 {offsets = [0, 128], sizes = [8, 64], strides = [1, 1]} : vector<8x192xf32> to vector<8x64xf32>
    %236 = arith.mulf %234, %212 : vector<8x64xf32>
    %237 = arith.mulf %233, %232 : vector<8x64xf32>
    %238 = arith.addf %236, %237 : vector<8x64xf32>
    %239 = math.tanh %238 : vector<8x64xf32>
    %240 = arith.mulf %235, %239 : vector<8x64xf32>
    %241 = vector.broadcast %c6_i32 : i32 to vector<8x64xi32>
    %242 = arith.cmpi sge, %241, %22 : vector<8x64xi32>
    %243 = arith.select %242, %240, %211 : vector<8x64xi1>, vector<8x64xf32>
    %244 = arith.select %242, %238, %212 : vector<8x64xi1>, vector<8x64xf32>
    %245 = vector.broadcast %c6_i32 : i32 to vector<8x64xi32>
    %246 = arith.cmpi eq, %245, %18 : vector<8x64xi32>
    %247 = arith.select %246, %243, %215 : vector<8x64xi1>, vector<8x64xf32>
    %c7_i32 = arith.constant 7 : i32
    %c8_i32_57 = arith.constant 8 : i32
    %248 = arith.muli %c7_i32, %c8_i32_57 : i32
    %249 = tpu.assume_multiple %248, 8 : i32
    %250 = arith.index_cast %249 : i32 to index
    %c0_58 = arith.constant 0 : index
    %251 = vector.load %arg9[%250, %c0_58] : memref<64x256xf32, #tpu.memory_space<vmem>>, vector<8x256xf32>
    %252 = arith.truncf %243 : vector<8x64xf32> to vector<8x64xbf16>
    %cst_59 = arith.constant dense<0.000000e+00> : vector<8x256xf32>
    %253 = tpu.matmul %252, %7, %cst_59 {dimension_numbers = #tpu.dot_dimension_numbers<[1], [0], [0], [1], [0, 0, 1, 1], [], []>} : vector<8x64xbf16>, vector<64x256xbf16>, vector<8x256xf32> -> vector<8x256xf32>
    %254 = arith.addf %251, %253 : vector<8x256xf32>
    %255 = vector.extract_strided_slice %254 {offsets = [0, 0], sizes = [8, 192], strides = [1, 1]} : vector<8x256xf32> to vector<8x192xf32>
    %cst_60 = arith.constant 5.000000e-01 : f32
    %256 = vector.broadcast %cst_60 : f32 to vector<8x192xf32>
    %257 = arith.mulf %256, %255 : vector<8x192xf32>
    %258 = math.tanh %257 : vector<8x192xf32>
    %cst_61 = arith.constant 5.000000e-01 : f32
    %259 = vector.broadcast %cst_61 : f32 to vector<8x192xf32>
    %260 = arith.mulf %259, %258 : vector<8x192xf32>
    %cst_62 = arith.constant 5.000000e-01 : f32
    %261 = vector.broadcast %cst_62 : f32 to vector<8x192xf32>
    %262 = arith.addf %260, %261 : vector<8x192xf32>
    %263 = vector.extract_strided_slice %254 {offsets = [0, 192], sizes = [8, 64], strides = [1, 1]} : vector<8x256xf32> to vector<8x64xf32>
    %264 = math.tanh %263 : vector<8x64xf32>
    %265 = vector.extract_strided_slice %262 {offsets = [0, 0], sizes = [8, 64], strides = [1, 1]} : vector<8x192xf32> to vector<8x64xf32>
    %266 = vector.extract_strided_slice %262 {offsets = [0, 64], sizes = [8, 64], strides = [1, 1]} : vector<8x192xf32> to vector<8x64xf32>
    %267 = vector.extract_strided_slice %262 {offsets = [0, 128], sizes = [8, 64], strides = [1, 1]} : vector<8x192xf32> to vector<8x64xf32>
    %268 = arith.mulf %266, %244 : vector<8x64xf32>
    %269 = arith.mulf %265, %264 : vector<8x64xf32>
    %270 = arith.addf %268, %269 : vector<8x64xf32>
    %271 = math.tanh %270 : vector<8x64xf32>
    %272 = arith.mulf %267, %271 : vector<8x64xf32>
    %273 = vector.broadcast %c7_i32 : i32 to vector<8x64xi32>
    %274 = arith.cmpi sge, %273, %22 : vector<8x64xi32>
    %275 = arith.select %274, %272, %243 : vector<8x64xi1>, vector<8x64xf32>
    %276 = arith.select %274, %270, %244 : vector<8x64xi1>, vector<8x64xf32>
    %277 = vector.broadcast %c7_i32 : i32 to vector<8x64xi32>
    %278 = arith.cmpi eq, %277, %18 : vector<8x64xi32>
    %279 = arith.select %278, %275, %247 : vector<8x64xi1>, vector<8x64xf32>
    %c8_i32_63 = arith.constant 8 : i32
    %280 = arith.truncf %279 : vector<8x64xf32> to vector<8x64xbf16>
    %c0_64 = arith.constant 0 : index
    %c0_65 = arith.constant 0 : index
    %281 = vector.load %arg6[%c0_64, %c0_65] : memref<64x128xbf16, #tpu.memory_space<vmem>>, vector<64x128xbf16>
    %cst_66 = arith.constant dense<0.000000e+00> : vector<8x128xf32>
    %282 = tpu.matmul %280, %281, %cst_66 {dimension_numbers = #tpu.dot_dimension_numbers<[1], [0], [0], [1], [0, 0, 1, 1], [], []>} : vector<8x64xbf16>, vector<64x128xbf16>, vector<8x128xf32> -> vector<8x128xf32>
    %c0_67 = arith.constant 0 : index
    %c0_68 = arith.constant 0 : index
    %283 = vector.load %arg7[%c0_67, %c0_68] : memref<1x128xf32, #tpu.memory_space<vmem>>, vector<1x128xf32>
    %284 = vector.broadcast %283 : vector<1x128xf32> to vector<8x128xf32>
    %285 = arith.addf %282, %284 : vector<8x128xf32>
    %cst_69 = arith.constant dense<0xFF800000> : vector<8xf32>
    %286 = vector.multi_reduction <maximumf>, %285, %cst_69 [1] : vector<8x128xf32> to vector<8xf32>
    %287 = vector.shape_cast %286 : vector<8xf32> to vector<8x1xf32>
    %288 = vector.broadcast %287 : vector<8x1xf32> to vector<8x128xf32>
    %289 = arith.subf %285, %288 : vector<8x128xf32>
    %290 = math.exp %289 : vector<8x128xf32>
    %cst_70 = arith.constant dense<0.000000e+00> : vector<8xf32>
    %291 = vector.multi_reduction <add>, %290, %cst_70 [1] : vector<8x128xf32> to vector<8xf32>
    %292 = vector.shape_cast %291 : vector<8xf32> to vector<8x1xf32>
    %293 = math.log %292 : vector<8x1xf32>
    %294 = arith.addf %287, %293 : vector<8x1xf32>
    %295 = vector.broadcast %294 : vector<8x1xf32> to vector<8x128xf32>
    %296 = arith.subf %285, %295 : vector<8x128xf32>
    %c0_71 = arith.constant 0 : index
    %c0_72 = arith.constant 0 : index
    %297 = vector.load %arg8[%c0_71, %c0_72] : memref<8x128xf32, #tpu.memory_space<vmem>>, vector<8x128xf32>
    tpu.vector_store %arg8[%c0_71, %c0_72], %296 {strides = array<i32>} : memref<8x128xf32, #tpu.memory_space<vmem>>, vector<8x128xf32>,
    return
  }
  func.func @transform_0(%arg0: i32) -> (i32, i32) {
    %c0_i32 = arith.constant 0 : i32
    %c0_i32_0 = arith.constant 0 : i32
    %c0_i32_1 = arith.constant 0 : i32
    return %c0_i32, %c0_i32_0 : i32, i32
  }
  func.func @transform_1(%arg0: i32) -> (i32, i32) {
    %c0_i32 = arith.constant 0 : i32
    %c0_i32_0 = arith.constant 0 : i32
    %c0_i32_1 = arith.constant 0 : i32
    return %c0_i32, %c0_i32_0 : i32, i32
  }
  func.func @transform_2(%arg0: i32) -> (i32, i32) {
    %c0_i32 = arith.constant 0 : i32
    %c0_i32_0 = arith.constant 0 : i32
    %c0_i32_1 = arith.constant 0 : i32
    return %c0_i32, %c0_i32_0 : i32, i32
  }
  func.func @transform_3(%arg0: i32) -> (i32, i32) {
    %c0_i32 = arith.constant 0 : i32
    %c0_i32_0 = arith.constant 0 : i32
    %c0_i32_1 = arith.constant 0 : i32
    return %c0_i32, %c0_i32_0 : i32, i32
  }
  func.func @transform_4(%arg0: i32) -> (i32, i32) {
    %c0_i32 = arith.constant 0 : i32
    %c0_i32_0 = arith.constant 0 : i32
    %c0_i32_1 = arith.constant 0 : i32
    return %c0_i32, %c0_i32_0 : i32, i32
  }
  func.func @transform_5(%arg0: i32) -> (i32, i32) {
    %c0_i32 = arith.constant 0 : i32
    %c0_i32_0 = arith.constant 0 : i32
    %c0_i32_1 = arith.constant 0 : i32
    return %c0_i32, %c0_i32_0 : i32, i32
  }
  func.func @transform_6(%arg0: i32) -> (i32, i32) {
    %c0_i32 = arith.constant 0 : i32
    %c0_i32_0 = arith.constant 0 : i32
    %c0_i32_1 = arith.constant 0 : i32
    return %c0_i32, %c0_i32_0 : i32, i32
  }
  func.func @transform_7(%arg0: i32) -> (i32, i32) {
    %c0_i32 = arith.constant 0 : i32
    %c0_i32_0 = arith.constant 0 : i32
    %c0_i32_1 = arith.constant 0 : i32
    return %c0_i32, %c0_i32_0 : i32, i32
  }
}

</mosaic_0001>

<llo_original>
// kernel: lstm_sentiment_forward.1
$region0: #{lstm_sentiment_forward.1}
  #allocation0 [shape = 'u32[]', space=smem, size = 0x4, offset = 0x4, fixed_abs, tag = 'smem constant byte address 0x4 - core index']
  #allocation1 [shape = 'u32[72,128]{1,0:T(1,128)}', space=vmem, size = 0x9000, scoped, tag = 'internal scratch']
  #allocation2 [shape = 'f32[64,256]{1,0:T(8,128)}', space=vmem, size = 0x10000, scoped, tag = 'scratch operand']
  %s0 = inlined_call_operand.vmem [shape: bf16[64,64], index: 0, kind: input, shape index: {}]
  %s1 = inlined_call_operand.vmem [shape: s32[8,1], index: 1, kind: input, shape index: {}]
  %s2 = inlined_call_operand.vmem [shape: bf16[64,256], index: 2, kind: input, shape index: {}]
  %s3 = inlined_call_operand.vmem [shape: bf16[64,256], index: 3, kind: input, shape index: {}]
  %s4 = inlined_call_operand.vmem [shape: f32[1,256], index: 4, kind: input, shape index: {}]
  %s5 = inlined_call_operand.vmem [shape: bf16[64,128], index: 5, kind: input, shape index: {}]
  %s6 = inlined_call_operand.vmem [shape: f32[1,128], index: 6, kind: input, shape index: {}]
  %s7 = inlined_call_operand.vmem [shape: f32[8,128], index: 7, kind: output, shape index: {}]
  %s8 = sld [smem:[#allocation0]]
  $region38: #{lstm_sentiment_forward.1} parent=0
    _
  %s10 = ssub.s32 1, %s8
  %s11 = scalar_select 0, %s10, %s8
  // Predicated region
  $region2: #{lstm_sentiment_forward.1} parent=0 // pred_check
    _
  $region3: #{lstm_sentiment_forward.1} parent=0 // pred_check_branch
    %13 = sbr.rel (0) target = $region5
  $region4: #{lstm_sentiment_forward.1} parent=0 // pred_region
    _
  $region5: #{lstm_sentiment_forward.1} parent=0 // pred_fallthru
    _
  // Predicated region
  $region6: #{lstm_sentiment_forward.1} parent=0 // pred_check
    _
  $region7: #{lstm_sentiment_forward.1} parent=0 // pred_check_branch
    %15 = sbr.rel (0) target = $region9
  $region8: #{lstm_sentiment_forward.1} parent=0 // pred_region
    _
  $region9: #{lstm_sentiment_forward.1} parent=0 // pred_fallthru
    _
  // Predicated region
  $region10: #{lstm_sentiment_forward.1} parent=0 // pred_check
    _
  $region11: #{lstm_sentiment_forward.1} parent=0 // pred_check_branch
    %17 = sbr.rel (0) target = $region13
  $region12: #{lstm_sentiment_forward.1} parent=0 // pred_region
    _
  $region13: #{lstm_sentiment_forward.1} parent=0 // pred_fallthru
    _
  // Predicated region
  $region14: #{lstm_sentiment_forward.1} parent=0 // pred_check
    _
  $region15: #{lstm_sentiment_forward.1} parent=0 // pred_check_branch
    %19 = sbr.rel (0) target = $region17
  $region16: #{lstm_sentiment_forward.1} parent=0 // pred_region
    _
  $region17: #{lstm_sentiment_forward.1} parent=0 // pred_fallthru
    _
  // Predicated region
  $region18: #{lstm_sentiment_forward.1} parent=0 // pred_check
    _
  $region19: #{lstm_sentiment_forward.1} parent=0 // pred_check_branch
    %21 = sbr.rel (0) target = $region21
  $region20: #{lstm_sentiment_forward.1} parent=0 // pred_region
    _
  $region21: #{lstm_sentiment_forward.1} parent=0 // pred_fallthru
    _
  // Predicated region
  $region22: #{lstm_sentiment_forward.1} parent=0 // pred_check
    _
  $region23: #{lstm_sentiment_forward.1} parent=0 // pred_check_branch
    %23 = sbr.rel (0) target = $region25
  $region24: #{lstm_sentiment_forward.1} parent=0 // pred_region
    _
  $region25: #{lstm_sentiment_forward.1} parent=0 // pred_fallthru
    _
  // Predicated region
  $region26: #{lstm_sentiment_forward.1} parent=0 // pred_check
    _
  $region27: #{lstm_sentiment_forward.1} parent=0 // pred_check_branch
    %25 = sbr.rel (0) target = $region29
  $region28: #{lstm_sentiment_forward.1} parent=0 // pred_region
    _
  $region29: #{lstm_sentiment_forward.1} parent=0 // pred_fallthru
    _
  %v27 = vld [vmem:[%s0] sm:$0xf]
  %v28 = vld [vmem:[%s0 + $0x4] sm:$0xf]
  %v29 = vld [vmem:[%s0 + $0x8] sm:$0xf]
  %v30 = vld [vmem:[%s0 + $0xc] sm:$0xf]
  %v31 = vld [vmem:[%s0 + $0x10] sm:$0xf]
  %v32 = vld [vmem:[%s0 + $0x14] sm:$0xf]
  %v33 = vld [vmem:[%s0 + $0x18] sm:$0xf]
  %v34 = vld [vmem:[%s0 + $0x1c] sm:$0xf]
  %v35 = vld [vmem:[%s2] sm:$0xff]
  %v36 = vld [vmem:[%s2 + $0x8] sm:$0xff]
  %v37 = vld [vmem:[%s2 + $0x10] sm:$0xff]
  %v38 = vld [vmem:[%s2 + $0x18] sm:$0xff]
  %v39 = vld [vmem:[%s2 + $0x20] sm:$0xff]
  %v40 = vld [vmem:[%s2 + $0x28] sm:$0xff]
  %v41 = vld [vmem:[%s2 + $0x30] sm:$0xff]
  %v42 = vld [vmem:[%s2 + $0x38] sm:$0xff]
  %v43 = vld [vmem:[%s4] sm:$0x3]
  %v45 = vperm.slane %v43, 0
  %v46 = vperm.slane %v43, 1
  %v57 = vunpack.c.l.b16 %v27
  %v58 = vunpack.c.l.b16 %v28
  %v59 = vunpack.c.l.b16 %v29
  %v60 = vunpack.c.l.b16 %v30
  %v61 = vunpack.c.l.b16 %v31
  %v62 = vunpack.c.l.b16 %v32
  %v63 = vunpack.c.l.b16 %v33
  %v64 = vunpack.c.l.b16 %v34
  %v65 = vpack.c.b16 %v58, %v57
  %v66 = vpack.c.b16 %v60, %v59
  %v67 = vpack.c.b16 %v62, %v61
  %v68 = vpack.c.b16 %v64, %v63
  %v77 = vunpack.c.l.b16 %v35
  %v78 = vunpack.c.h.b16 %v35
  %v79 = vunpack.c.l.b16 %v36
  %v80 = vunpack.c.h.b16 %v36
  %v81 = vunpack.c.l.b16 %v37
  %v82 = vunpack.c.h.b16 %v37
  %v83 = vunpack.c.l.b16 %v38
  %v84 = vunpack.c.h.b16 %v38
  %v85 = vunpack.c.l.b16 %v39
  %v86 = vunpack.c.h.b16 %v39
  %v87 = vunpack.c.l.b16 %v40
  %v88 = vunpack.c.h.b16 %v40
  %v89 = vunpack.c.l.b16 %v41
  %v90 = vunpack.c.h.b16 %v41
  %v91 = vunpack.c.l.b16 %v42
  %v92 = vunpack.c.h.b16 %v42
  %v93 = vpack.c.b16 %v79, %v77
  %v94 = vpack.c.b16 %v80, %v78
  %v95 = vpack.c.b16 %v83, %v81
  %v96 = vpack.c.b16 %v84, %v82
  %v97 = vpack.c.b16 %v87, %v85
  %v98 = vpack.c.b16 %v88, %v86
  %v99 = vpack.c.b16 %v91, %v89
  %v100 = vpack.c.b16 %v92, %v90
  %vm109 = vcmask 523264
  %v111 = vsel %vm109, %v65, 0
  %v114 = vsel %vm109, %v66, 0
  %v117 = vsel %vm109, %v67, 0
  %v120 = vsel %vm109, %v68, 0
  %122 = vmatpush.bf16.msra.mxu0 0
  %123 = vmatpush.bf16.msra.mxu0 0
  %124 = vmatpush.bf16.msra.mxu0 0
  %125 = vmatpush.bf16.msra.mxu0 0
  %126 = vmatpush.bf16.msra.mxu0 %v99
  %127 = vmatpush.bf16.msra.mxu0 %v97
  %128 = vmatpush.bf16.msra.mxu0 %v95
  %129 = vmatpush.bf16.msra.mxu0 %v93
  %130 = vmatmul.bf16.gmra.mxu0 %v111
  %v131 = vpop.f32.mrf.mxu0
  %v132 = vadd.f32 %v45, %v131
  %v133 = vpop.f32.mrf.mxu0
  %v134 = vadd.f32 %v45, %v133
  %135 = vmatmul.bf16.gmra.mxu0 %v114
  %v136 = vpop.f32.mrf.mxu0
  %v137 = vadd.f32 %v45, %v136
  %v138 = vpop.f32.mrf.mxu0
  %v139 = vadd.f32 %v45, %v138
  %140 = vmatmul.bf16.gmra.mxu0 %v117
  %v141 = vpop.f32.mrf.mxu0
  %v142 = vadd.f32 %v45, %v141
  %v143 = vpop.f32.mrf.mxu0
  %v144 = vadd.f32 %v45, %v143
  %145 = vmatmul.bf16.gmra.mxu0 %v120
  %v146 = vpop.f32.mrf.mxu0
  %v147 = vadd.f32 %v45, %v146
  %v148 = vpop.f32.mrf.mxu0
  %v149 = vadd.f32 %v45, %v148
  %150 = vdwg.mxu0
  %151 = vmatpush.bf16.msra.mxu0 0
  %152 = vmatpush.bf16.msra.mxu0 0
  %153 = vmatpush.bf16.msra.mxu0 0
  %154 = vmatpush.bf16.msra.mxu0 0
  %155 = vmatpush.bf16.msra.mxu0 %v100
  %156 = vmatpush.bf16.msra.mxu0 %v98
  %157 = vmatpush.bf16.msra.mxu0 %v96
  %158 = vmatpush.bf16.msra.mxu0 %v94
  %159 = vmatmul.bf16.gmra.mxu0 %v111
  %v160 = vpop.f32.mrf.mxu0
  %v161 = vadd.f32 %v46, %v160
  %v162 = vpop.f32.mrf.mxu0
  %v163 = vadd.f32 %v46, %v162
  %164 = vmatmul.bf16.gmra.mxu0 %v114
  %v165 = vpop.f32.mrf.mxu0
  %v166 = vadd.f32 %v46, %v165
  %v167 = vpop.f32.mrf.mxu0
  %v168 = vadd.f32 %v46, %v167
  %169 = vmatmul.bf16.gmra.mxu0 %v117
  %v170 = vpop.f32.mrf.mxu0
  %v171 = vadd.f32 %v46, %v170
  %v172 = vpop.f32.mrf.mxu0
  %v173 = vadd.f32 %v46, %v172
  %174 = vmatmul.bf16.gmra.mxu0 %v120
  %v175 = vpop.f32.mrf.mxu0
  %v176 = vadd.f32 %v46, %v175
  %v177 = vpop.f32.mrf.mxu0
  %v178 = vadd.f32 %v46, %v177
  %179 = vdwg.mxu0
  %180 = vst [vmem:[#allocation2] sm:$0xff] %v132
  %181 = vst [vmem:[#allocation2 + $0x8] sm:$0xff] %v161
  %182 = vst [vmem:[#allocation2 + $0x10] sm:$0xff] %v134
  %183 = vst [vmem:[#allocation2 + $0x18] sm:$0xff] %v163
  %184 = vst [vmem:[#allocation2 + $0x20] sm:$0xff] %v137
  %185 = vst [vmem:[#allocation2 + $0x28] sm:$0xff] %v166
  %186 = vst [vmem:[#allocation2 + $0x30] sm:$0xff] %v139
  %187 = vst [vmem:[#allocation2 + $0x38] sm:$0xff] %v168
  %188 = vst [vmem:[#allocation2 + $0x40] sm:$0xff] %v142
  %189 = vst [vmem:[#allocation2 + $0x48] sm:$0xff] %v171
  %190 = vst [vmem:[#allocation2 + $0x50] sm:$0xff] %v144
  %191 = vst [vmem:[#allocation2 + $0x58] sm:$0xff] %v173
  %192 = vst [vmem:[#allocation2 + $0x60] sm:$0xff] %v147
  %193 = vst [vmem:[#allocation2 + $0x68] sm:$0xff] %v176
  %194 = vst [vmem:[#allocation2 + $0x70] sm:$0xff] %v149
  %195 = vst [vmem:[#allocation2 + $0x78] sm:$0xff] %v178
  %v196 = vld [vmem:[%s3] sm:$0xff]
  %v197 = vld [vmem:[%s3 + $0x8] sm:$0xff]
  %v198 = vld [vmem:[%s3 + $0x10] sm:$0xff]
  %v199 = vld [vmem:[%s3 + $0x18] sm:$0xff]
  %v200 = vld [vmem:[%s3 + $0x20] sm:$0xff]
  %v201 = vld [vmem:[%s3 + $0x28] sm:$0xff]
  %v202 = vld [vmem:[%s3 + $0x30] sm:$0xff]
  %v203 = vld [vmem:[%s3 + $0x38] sm:$0xff]
  %v204 = vlaneseq
  %v205 = vand.u32 %v204, 127
  %vm206 = vcmp.lt.s32.totalorder %v205, 32
  %v207 = vld [vmem:[%s1] sm:$0xff]
  %208 = vset.pattern.permute.xlu0 0
  %209 = vperm.xlu0 %208, %v207
  %v210 = vpop.permute.xlu0 %209
  %v211 = vsub.s32 %v210, 1
  %v212 = vsub.s32 8, %v210
  %v213 = vsel %vm206, %v211, %v212
  %v214 = vsel %vm206, 0, %v212
  %s215 = smul.u32 0, 2
  %s216 = smul.addr %s215, 8
  %s217 = scalar_lea.vmem [#allocation2], %s216
  %v218 = vld [vmem:[%s217] sm:$0xff]
  %v219 = vld [vmem:[%s217 + $0x8] sm:$0xff]
  %v228 = vunpack.c.l.b16 %v196
  %v229 = vunpack.c.h.b16 %v196
  %v230 = vunpack.c.l.b16 %v197
  %v231 = vunpack.c.h.b16 %v197
  %v232 = vunpack.c.l.b16 %v198
  %v233 = vunpack.c.h.b16 %v198
  %v234 = vunpack.c.l.b16 %v199
  %v235 = vunpack.c.h.b16 %v199
  %v236 = vunpack.c.l.b16 %v200
  %v237 = vunpack.c.h.b16 %v200
  %v238 = vunpack.c.l.b16 %v201
  %v239 = vunpack.c.h.b16 %v201
  %v240 = vunpack.c.l.b16 %v202
  %v241 = vunpack.c.h.b16 %v202
  %v242 = vunpack.c.l.b16 %v203
  %v243 = vunpack.c.h.b16 %v203
  %v244 = vpack.c.b16 %v230, %v228
  %v245 = vpack.c.b16 %v231, %v229
  %v246 = vpack.c.b16 %v234, %v232
  %v247 = vpack.c.b16 %v235, %v233
  %v248 = vpack.c.b16 %v238, %v236
  %v249 = vpack.c.b16 %v239, %v237
  %v250 = vpack.c.b16 %v242, %v240
  %v251 = vpack.c.b16 %v243, %v241
  %v261 = vsel %vm109, 0, 0
  %263 = vmatpush.bf16.msra.mxu0 0
  %264 = vmatpush.bf16.msra.mxu0 0
  %265 = vmatpush.bf16.msra.mxu0 0
  %266 = vmatpush.bf16.msra.mxu0 0
  %267 = vmatpush.bf16.msra.mxu0 %v250
  %268 = vmatpush.bf16.msra.mxu0 %v248
  %269 = vmatpush.bf16.msra.mxu0 %v246
  %270 = vmatpush.bf16.msra.mxu0 %v244
  %271 = vmatmul.bf16.gmra.mxu0 %v261
  %v272 = vpop.f32.mrf.mxu0
  %v273 = vadd.f32 0.0, %v272
  %v274 = vpop.f32.mrf.mxu0
  %275 = vdwg.mxu0
  %276 = vmatpush.bf16.msra.mxu0 0
  %277 = vmatpush.bf16.msra.mxu0 0
  %278 = vmatpush.bf16.msra.mxu0 0
  %279 = vmatpush.bf16.msra.mxu0 0
  %280 = vmatpush.bf16.msra.mxu0 %v251
  %281 = vmatpush.bf16.msra.mxu0 %v249
  %282 = vmatpush.bf16.msra.mxu0 %v247
  %283 = vmatpush.bf16.msra.mxu0 %v245
  %284 = vmatmul.bf16.gmra.mxu0 %v261
  %v285 = vpop.f32.mrf.mxu0
  %v286 = vadd.f32 0.0, %v285
  %v287 = vpop.f32.mrf.mxu0
  %288 = vdwg.mxu0
  %v289 = vadd.f32 %v218, %v273
  %v290 = vadd.f32 %v219, %v286
  %v291 = vmul.f32 %v289, 0.5
  %v292 = vmul.f32 %v290, 0.5
  %v293 = vtanh.pop %v291
  %v294 = vtanh.pop %v292
  %v295 = vmul.f32 %v293, 0.5
  %v296 = vmul.f32 %v294, 0.5
  %v297 = vadd.f32 %v295, 0.5
  %v298 = vadd.f32 %v296, 0.5
  %v299 = vtanh.pop %v290
  %v300 = vmul.f32 %v297, 0.0
  %302 = vrot.lane.b32.xlu0 %v299, 64
  %v303 = vpop.permute.xlu0 %302
  %v305 = vmul.f32 %v297, %v303
  %307 = vrot.lane.b32.xlu0 %v305, 64
  %v308 = vpop.permute.xlu0 %307
  %v310 = vadd.f32 %v300, %v308
  %v311 = vtanh.pop %v310
  %313 = vrot.lane.b32.xlu0 %v311, 64
  %v314 = vpop.permute.xlu0 %313
  %v316 = vmul.f32 %v298, %v314
  %vm317 = vcmp.le.s32.totalorder %v214, 0
  %v318 = vsel %vm317, %v316, 0.0
  %320 = vrot.lane.b32.xlu0 %v310, 64
  %v321 = vpop.permute.xlu0 %320
  %v323 = vsel %vm317, %v321, 0.0
  %vm324 = vcmp.eq.s32.totalorder %v213, 0
  %v325 = vsel %vm324, %v318, 0.0
  %s326 = smul.u32 1, 2
  %s327 = smul.addr %s326, 8
  %s328 = scalar_lea.vmem [#allocation2], %s327
  %v329 = vld [vmem:[%s328] sm:$0xff]
  %v330 = vld [vmem:[%s328 + $0x8] sm:$0xff]
  %v331 = vpack.c.bf16 %v318, %v318
  %v333 = vsel %vm109, %v331, 0
  %335 = vmatpush.bf16.msra.mxu0 0
  %336 = vmatpush.bf16.msra.mxu0 0
  %337 = vmatpush.bf16.msra.mxu0 0
  %338 = vmatpush.bf16.msra.mxu0 0
  %339 = vmatpush.bf16.msra.mxu0 %v250
  %340 = vmatpush.bf16.msra.mxu0 %v248
  %341 = vmatpush.bf16.msra.mxu0 %v246
  %342 = vmatpush.bf16.msra.mxu0 %v244
  %343 = vmatmul.bf16.gmra.mxu0 %v333
  %v344 = vpop.f32.mrf.mxu0
  %v345 = vadd.f32 0.0, %v344
  %v346 = vpop.f32.mrf.mxu0
  %347 = vdwg.mxu0
  %348 = vmatpush.bf16.msra.mxu0 0
  %349 = vmatpush.bf16.msra.mxu0 0
  %350 = vmatpush.bf16.msra.mxu0 0
  %351 = vmatpush.bf16.msra.mxu0 0
  %352 = vmatpush.bf16.msra.mxu0 %v251
  %353 = vmatpush.bf16.msra.mxu0 %v249
  %354 = vmatpush.bf16.msra.mxu0 %v247
  %355 = vmatpush.bf16.msra.mxu0 %v245
  %356 = vmatmul.bf16.gmra.mxu0 %v333
  %v357 = vpop.f32.mrf.mxu0
  %v358 = vadd.f32 0.0, %v357
  %v359 = vpop.f32.mrf.mxu0
  %360 = vdwg.mxu0
  %v361 = vadd.f32 %v329, %v345
  %v362 = vadd.f32 %v330, %v358
  %v363 = vmul.f32 %v361, 0.5
  %v364 = vmul.f32 %v362, 0.5
  %v365 = vtanh.pop %v363
  %v366 = vtanh.pop %v364
  %v367 = vmul.f32 %v365, 0.5
  %v368 = vmul.f32 %v366, 0.5
  %v369 = vadd.f32 %v367, 0.5
  %v370 = vadd.f32 %v368, 0.5
  %v371 = vtanh.pop %v362
  %373 = vrot.lane.b32.xlu0 %v323, 64
  %v374 = vpop.permute.xlu0 %373
  %v376 = vmul.f32 %v369, %v374
  %378 = vrot.lane.b32.xlu0 %v371, 64
  %v379 = vpop.permute.xlu0 %378
  %v381 = vmul.f32 %v369, %v379
  %383 = vrot.lane.b32.xlu0 %v381, 64
  %v384 = vpop.permute.xlu0 %383
  %v386 = vadd.f32 %v376, %v384
  %v387 = vtanh.pop %v386
  %389 = vrot.lane.b32.xlu0 %v387, 64
  %v390 = vpop.permute.xlu0 %389
  %v392 = vmul.f32 %v370, %v390
  %vm393 = vcmp.le.s32.totalorder %v214, 1
  %v394 = vsel %vm393, %v392, %v318
  %396 = vrot.lane.b32.xlu0 %v386, 64
  %v397 = vpop.permute.xlu0 %396
  %v399 = vsel %vm393, %v397, %v323
  %vm400 = vcmp.eq.s32.totalorder %v213, 1
  %v401 = vsel %vm400, %v394, %v325
  %s402 = smul.u32 2, 2
  %s403 = smul.addr %s402, 8
  %s404 = scalar_lea.vmem [#allocation2], %s403
  %v405 = vld [vmem:[%s404] sm:$0xff]
  %v406 = vld [vmem:[%s404 + $0x8] sm:$0xff]
  %v407 = vpack.c.bf16 %v394, %v394
  %v409 = vsel %vm109, %v407, 0
  %411 = vmatpush.bf16.msra.mxu0 0
  %412 = vmatpush.bf16.msra.mxu0 0
  %413 = vmatpush.bf16.msra.mxu0 0
  %414 = vmatpush.bf16.msra.mxu0 0
  %415 = vmatpush.bf16.msra.mxu0 %v250
  %416 = vmatpush.bf16.msra.mxu0 %v248
  %417 = vmatpush.bf16.msra.mxu0 %v246
  %418 = vmatpush.bf16.msra.mxu0 %v244
  %419 = vmatmul.bf16.gmra.mxu0 %v409
  %v420 = vpop.f32.mrf.mxu0
  %v421 = vadd.f32 0.0, %v420
  %v422 = vpop.f32.mrf.mxu0
  %423 = vdwg.mxu0
  %424 = vmatpush.bf16.msra.mxu0 0
  %425 = vmatpush.bf16.msra.mxu0 0
  %426 = vmatpush.bf16.msra.mxu0 0
  %427 = vmatpush.bf16.msra.mxu0 0
  %428 = vmatpush.bf16.msra.mxu0 %v251
  %429 = vmatpush.bf16.msra.mxu0 %v249
  %430 = vmatpush.bf16.msra.mxu0 %v247
  %431 = vmatpush.bf16.msra.mxu0 %v245
  %432 = vmatmul.bf16.gmra.mxu0 %v409
  %v433 = vpop.f32.mrf.mxu0
  %v434 = vadd.f32 0.0, %v433
  %v435 = vpop.f32.mrf.mxu0
  %436 = vdwg.mxu0
  %v437 = vadd.f32 %v405, %v421
  %v438 = vadd.f32 %v406, %v434
  %v439 = vmul.f32 %v437, 0.5
  %v440 = vmul.f32 %v438, 0.5
  %v441 = vtanh.pop %v439
  %v442 = vtanh.pop %v440
  %v443 = vmul.f32 %v441, 0.5
  %v444 = vmul.f32 %v442, 0.5
  %v445 = vadd.f32 %v443, 0.5
  %v446 = vadd.f32 %v444, 0.5
  %v447 = vtanh.pop %v438
  %449 = vrot.lane.b32.xlu0 %v399, 64
  %v450 = vpop.permute.xlu0 %449
  %v452 = vmul.f32 %v445, %v450
  %454 = vrot.lane.b32.xlu0 %v447, 64
  %v455 = vpop.permute.xlu0 %454
  %v457 = vmul.f32 %v445, %v455
  %459 = vrot.lane.b32.xlu0 %v457, 64
  %v460 = vpop.permute.xlu0 %459
  %v462 = vadd.f32 %v452, %v460
  %v463 = vtanh.pop %v462
  %465 = vrot.lane.b32.xlu0 %v463, 64
  %v466 = vpop.permute.xlu0 %465
  %v468 = vmul.f32 %v446, %v466
  %vm469 = vcmp.le.s32.totalorder %v214, 2
  %v470 = vsel %vm469, %v468, %v394
  %472 = vrot.lane.b32.xlu0 %v462, 64
  %v473 = vpop.permute.xlu0 %472
  %v475 = vsel %vm469, %v473, %v399
  %vm476 = vcmp.eq.s32.totalorder %v213, 2
  %v477 = vsel %vm476, %v470, %v401
  %s478 = smul.u32 3, 2
  %s479 = smul.addr %s478, 8
  %s480 = scalar_lea.vmem [#allocation2], %s479
  %v481 = vld [vmem:[%s480] sm:$0xff]
  %v482 = vld [vmem:[%s480 + $0x8] sm:$0xff]
  %v483 = vpack.c.bf16 %v470, %v470
  %v485 = vsel %vm109, %v483, 0
  %487 = vmatpush.bf16.msra.mxu0 0
  %488 = vmatpush.bf16.msra.mxu0 0
  %489 = vmatpush.bf16.msra.mxu0 0
  %490 = vmatpush.bf16.msra.mxu0 0
  %491 = vmatpush.bf16.msra.mxu0 %v250
  %492 = vmatpush.bf16.msra.mxu0 %v248
  %493 = vmatpush.bf16.msra.mxu0 %v246
  %494 = vmatpush.bf16.msra.mxu0 %v244
  %495 = vmatmul.bf16.gmra.mxu0 %v485
  %v496 = vpop.f32.mrf.mxu0
  %v497 = vadd.f32 0.0, %v496
  %v498 = vpop.f32.mrf.mxu0
  %499 = vdwg.mxu0
  %500 = vmatpush.bf16.msra.mxu0 0
  %501 = vmatpush.bf16.msra.mxu0 0
  %502 = vmatpush.bf16.msra.mxu0 0
  %503 = vmatpush.bf16.msra.mxu0 0
  %504 = vmatpush.bf16.msra.mxu0 %v251
  %505 = vmatpush.bf16.msra.mxu0 %v249
  %506 = vmatpush.bf16.msra.mxu0 %v247
  %507 = vmatpush.bf16.msra.mxu0 %v245
  %508 = vmatmul.bf16.gmra.mxu0 %v485
  %v509 = vpop.f32.mrf.mxu0
  %v510 = vadd.f32 0.0, %v509
  %v511 = vpop.f32.mrf.mxu0
  %512 = vdwg.mxu0
  %v513 = vadd.f32 %v481, %v497
  %v514 = vadd.f32 %v482, %v510
  %v515 = vmul.f32 %v513, 0.5
  %v516 = vmul.f32 %v514, 0.5
  %v517 = vtanh.pop %v515
  %v518 = vtanh.pop %v516
  %v519 = vmul.f32 %v517, 0.5
  %v520 = vmul.f32 %v518, 0.5
  %v521 = vadd.f32 %v519, 0.5
  %v522 = vadd.f32 %v520, 0.5
  %v523 = vtanh.pop %v514
  %525 = vrot.lane.b32.xlu0 %v475, 64
  %v526 = vpop.permute.xlu0 %525
  %v528 = vmul.f32 %v521, %v526
  %530 = vrot.lane.b32.xlu0 %v523, 64
  %v531 = vpop.permute.xlu0 %530
  %v533 = vmul.f32 %v521, %v531
  %535 = vrot.lane.b32.xlu0 %v533, 64
  %v536 = vpop.permute.xlu0 %535
  %v538 = vadd.f32 %v528, %v536
  %v539 = vtanh.pop %v538
  %541 = vrot.lane.b32.xlu0 %v539, 64
  %v542 = vpop.permute.xlu0 %541
  %v544 = vmul.f32 %v522, %v542
  %vm545 = vcmp.le.s32.totalorder %v214, 3
  %v546 = vsel %vm545, %v544, %v470
  %548 = vrot.lane.b32.xlu0 %v538, 64
  %v549 = vpop.permute.xlu0 %548
  %v551 = vsel %vm545, %v549, %v475
  %vm552 = vcmp.eq.s32.totalorder %v213, 3
  %v553 = vsel %vm552, %v546, %v477
  %s554 = smul.u32 4, 2
  %s555 = smul.addr %s554, 8
  %s556 = scalar_lea.vmem [#allocation2], %s555
  %v557 = vld [vmem:[%s556] sm:$0xff]
  %v558 = vld [vmem:[%s556 + $0x8] sm:$0xff]
  %v559 = vpack.c.bf16 %v546, %v546
  %v561 = vsel %vm109, %v559, 0
  %563 = vmatpush.bf16.msra.mxu0 0
  %564 = vmatpush.bf16.msra.mxu0 0
  %565 = vmatpush.bf16.msra.mxu0 0
  %566 = vmatpush.bf16.msra.mxu0 0
  %567 = vmatpush.bf16.msra.mxu0 %v250
  %568 = vmatpush.bf16.msra.mxu0 %v248
  %569 = vmatpush.bf16.msra.mxu0 %v246
  %570 = vmatpush.bf16.msra.mxu0 %v244
  %571 = vmatmul.bf16.gmra.mxu0 %v561
  %v572 = vpop.f32.mrf.mxu0
  %v573 = vadd.f32 0.0, %v572
  %v574 = vpop.f32.mrf.mxu0
  %575 = vdwg.mxu0
  %576 = vmatpush.bf16.msra.mxu0 0
  %577 = vmatpush.bf16.msra.mxu0 0
  %578 = vmatpush.bf16.msra.mxu0 0
  %579 = vmatpush.bf16.msra.mxu0 0
  %580 = vmatpush.bf16.msra.mxu0 %v251
  %581 = vmatpush.bf16.msra.mxu0 %v249
  %582 = vmatpush.bf16.msra.mxu0 %v247
  %583 = vmatpush.bf16.msra.mxu0 %v245
  %584 = vmatmul.bf16.gmra.mxu0 %v561
  %v585 = vpop.f32.mrf.mxu0
  %v586 = vadd.f32 0.0, %v585
  %v587 = vpop.f32.mrf.mxu0
  %588 = vdwg.mxu0
  %v589 = vadd.f32 %v557, %v573
  %v590 = vadd.f32 %v558, %v586
  %v591 = vmul.f32 %v589, 0.5
  %v592 = vmul.f32 %v590, 0.5
  %v593 = vtanh.pop %v591
  %v594 = vtanh.pop %v592
  %v595 = vmul.f32 %v593, 0.5
  %v596 = vmul.f32 %v594, 0.5
  %v597 = vadd.f32 %v595, 0.5
  %v598 = vadd.f32 %v596, 0.5
  %v599 = vtanh.pop %v590
  %601 = vrot.lane.b32.xlu0 %v551, 64
  %v602 = vpop.permute.xlu0 %601
  %v604 = vmul.f32 %v597, %v602
  %606 = vrot.lane.b32.xlu0 %v599, 64
  %v607 = vpop.permute.xlu0 %606
  %v609 = vmul.f32 %v597, %v607
  %611 = vrot.lane.b32.xlu0 %v609, 64
  %v612 = vpop.permute.xlu0 %611
  %v614 = vadd.f32 %v604, %v612
  %v615 = vtanh.pop %v614
  %617 = vrot.lane.b32.xlu0 %v615, 64
  %v618 = vpop.permute.xlu0 %617
  %v620 = vmul.f32 %v598, %v618
  %vm621 = vcmp.le.s32.totalorder %v214, 4
  %v622 = vsel %vm621, %v620, %v546
  %624 = vrot.lane.b32.xlu0 %v614, 64
  %v625 = vpop.permute.xlu0 %624
  %v627 = vsel %vm621, %v625, %v551
  %vm628 = vcmp.eq.s32.totalorder %v213, 4
  %v629 = vsel %vm628, %v622, %v553
  %s630 = smul.u32 5, 2
  %s631 = smul.addr %s630, 8
  %s632 = scalar_lea.vmem [#allocation2], %s631
  %v633 = vld [vmem:[%s632] sm:$0xff]
  %v634 = vld [vmem:[%s632 + $0x8] sm:$0xff]
  %v635 = vpack.c.bf16 %v622, %v622
  %v637 = vsel %vm109, %v635, 0
  %639 = vmatpush.bf16.msra.mxu0 0
  %640 = vmatpush.bf16.msra.mxu0 0
  %641 = vmatpush.bf16.msra.mxu0 0
  %642 = vmatpush.bf16.msra.mxu0 0
  %643 = vmatpush.bf16.msra.mxu0 %v250
  %644 = vmatpush.bf16.msra.mxu0 %v248
  %645 = vmatpush.bf16.msra.mxu0 %v246
  %646 = vmatpush.bf16.msra.mxu0 %v244
  %647 = vmatmul.bf16.gmra.mxu0 %v637
  %v648 = vpop.f32.mrf.mxu0
  %v649 = vadd.f32 0.0, %v648
  %v650 = vpop.f32.mrf.mxu0
  %651 = vdwg.mxu0
  %652 = vmatpush.bf16.msra.mxu0 0
  %653 = vmatpush.bf16.msra.mxu0 0
  %654 = vmatpush.bf16.msra.mxu0 0
  %655 = vmatpush.bf16.msra.mxu0 0
  %656 = vmatpush.bf16.msra.mxu0 %v251
  %657 = vmatpush.bf16.msra.mxu0 %v249
  %658 = vmatpush.bf16.msra.mxu0 %v247
  %659 = vmatpush.bf16.msra.mxu0 %v245
  %660 = vmatmul.bf16.gmra.mxu0 %v637
  %v661 = vpop.f32.mrf.mxu0
  %v662 = vadd.f32 0.0, %v661
  %v663 = vpop.f32.mrf.mxu0
  %664 = vdwg.mxu0
  %v665 = vadd.f32 %v633, %v649
  %v666 = vadd.f32 %v634, %v662
  %v667 = vmul.f32 %v665, 0.5
  %v668 = vmul.f32 %v666, 0.5
  %v669 = vtanh.pop %v667
  %v670 = vtanh.pop %v668
  %v671 = vmul.f32 %v669, 0.5
  %v672 = vmul.f32 %v670, 0.5
  %v673 = vadd.f32 %v671, 0.5
  %v674 = vadd.f32 %v672, 0.5
  %v675 = vtanh.pop %v666
  %677 = vrot.lane.b32.xlu0 %v627, 64
  %v678 = vpop.permute.xlu0 %677
  %v680 = vmul.f32 %v673, %v678
  %682 = vrot.lane.b32.xlu0 %v675, 64
  %v683 = vpop.permute.xlu0 %682
  %v685 = vmul.f32 %v673, %v683
  %687 = vrot.lane.b32.xlu0 %v685, 64
  %v688 = vpop.permute.xlu0 %687
  %v690 = vadd.f32 %v680, %v688
  %v691 = vtanh.pop %v690
  %693 = vrot.lane.b32.xlu0 %v691, 64
  %v694 = vpop.permute.xlu0 %693
  %v696 = vmul.f32 %v674, %v694
  %vm697 = vcmp.le.s32.totalorder %v214, 5
  %v698 = vsel %vm697, %v696, %v622
  %700 = vrot.lane.b32.xlu0 %v690, 64
  %v701 = vpop.permute.xlu0 %700
  %v703 = vsel %vm697, %v701, %v627
  %vm704 = vcmp.eq.s32.totalorder %v213, 5
  %v705 = vsel %vm704, %v698, %v629
  %s706 = smul.u32 6, 2
  %s707 = smul.addr %s706, 8
  %s708 = scalar_lea.vmem [#allocation2], %s707
  %v709 = vld [vmem:[%s708] sm:$0xff]
  %v710 = vld [vmem:[%s708 + $0x8] sm:$0xff]
  %v711 = vpack.c.bf16 %v698, %v698
  %v713 = vsel %vm109, %v711, 0
  %715 = vmatpush.bf16.msra.mxu0 0
  %716 = vmatpush.bf16.msra.mxu0 0
  %717 = vmatpush.bf16.msra.mxu0 0
  %718 = vmatpush.bf16.msra.mxu0 0
  %719 = vmatpush.bf16.msra.mxu0 %v250
  %720 = vmatpush.bf16.msra.mxu0 %v248
  %721 = vmatpush.bf16.msra.mxu0 %v246
  %722 = vmatpush.bf16.msra.mxu0 %v244
  %723 = vmatmul.bf16.gmra.mxu0 %v713
  %v724 = vpop.f32.mrf.mxu0
  %v725 = vadd.f32 0.0, %v724
  %v726 = vpop.f32.mrf.mxu0
  %727 = vdwg.mxu0
  %728 = vmatpush.bf16.msra.mxu0 0
  %729 = vmatpush.bf16.msra.mxu0 0
  %730 = vmatpush.bf16.msra.mxu0 0
  %731 = vmatpush.bf16.msra.mxu0 0
  %732 = vmatpush.bf16.msra.mxu0 %v251
  %733 = vmatpush.bf16.msra.mxu0 %v249
  %734 = vmatpush.bf16.msra.mxu0 %v247
  %735 = vmatpush.bf16.msra.mxu0 %v245
  %736 = vmatmul.bf16.gmra.mxu0 %v713
  %v737 = vpop.f32.mrf.mxu0
  %v738 = vadd.f32 0.0, %v737
  %v739 = vpop.f32.mrf.mxu0
  %740 = vdwg.mxu0
  %v741 = vadd.f32 %v709, %v725
  %v742 = vadd.f32 %v710, %v738
  %v743 = vmul.f32 %v741, 0.5
  %v744 = vmul.f32 %v742, 0.5
  %v745 = vtanh.pop %v743
  %v746 = vtanh.pop %v744
  %v747 = vmul.f32 %v745, 0.5
  %v748 = vmul.f32 %v746, 0.5
  %v749 = vadd.f32 %v747, 0.5
  %v750 = vadd.f32 %v748, 0.5
  %v751 = vtanh.pop %v742
  %753 = vrot.lane.b32.xlu0 %v703, 64
  %v754 = vpop.permute.xlu0 %753
  %v756 = vmul.f32 %v749, %v754
  %758 = vrot.lane.b32.xlu0 %v751, 64
  %v759 = vpop.permute.xlu0 %758
  %v761 = vmul.f32 %v749, %v759
  %763 = vrot.lane.b32.xlu0 %v761, 64
  %v764 = vpop.permute.xlu0 %763
  %v766 = vadd.f32 %v756, %v764
  %v767 = vtanh.pop %v766
  %769 = vrot.lane.b32.xlu0 %v767, 64
  %v770 = vpop.permute.xlu0 %769
  %v772 = vmul.f32 %v750, %v770
  %vm773 = vcmp.le.s32.totalorder %v214, 6
  %v774 = vsel %vm773, %v772, %v698
  %776 = vrot.lane.b32.xlu0 %v766, 64
  %v777 = vpop.permute.xlu0 %776
  %v779 = vsel %vm773, %v777, %v703
  %vm780 = vcmp.eq.s32.totalorder %v213, 6
  %v781 = vsel %vm780, %v774, %v705
  %s782 = smul.u32 7, 2
  %s783 = smul.addr %s782, 8
  %s784 = scalar_lea.vmem [#allocation2], %s783
  %v785 = vld [vmem:[%s784] sm:$0xff]
  %v786 = vld [vmem:[%s784 + $0x8] sm:$0xff]
  %v787 = vpack.c.bf16 %v774, %v774
  %v789 = vsel %vm109, %v787, 0
  %791 = vmatpush.bf16.msra.mxu0 0
  %792 = vmatpush.bf16.msra.mxu0 0
  %793 = vmatpush.bf16.msra.mxu0 0
  %794 = vmatpush.bf16.msra.mxu0 0
  %795 = vmatpush.bf16.msra.mxu0 %v250
  %796 = vmatpush.bf16.msra.mxu0 %v248
  %797 = vmatpush.bf16.msra.mxu0 %v246
  %798 = vmatpush.bf16.msra.mxu0 %v244
  %799 = vmatmul.bf16.gmra.mxu0 %v789
  %v800 = vpop.f32.mrf.mxu0
  %v801 = vadd.f32 0.0, %v800
  %v802 = vpop.f32.mrf.mxu0
  %803 = vdwg.mxu0
  %804 = vmatpush.bf16.msra.mxu0 0
  %805 = vmatpush.bf16.msra.mxu0 0
  %806 = vmatpush.bf16.msra.mxu0 0
  %807 = vmatpush.bf16.msra.mxu0 0
  %808 = vmatpush.bf16.msra.mxu0 %v251
  %809 = vmatpush.bf16.msra.mxu0 %v249
  %810 = vmatpush.bf16.msra.mxu0 %v247
  %811 = vmatpush.bf16.msra.mxu0 %v245
  %812 = vmatmul.bf16.gmra.mxu0 %v789
  %v813 = vpop.f32.mrf.mxu0
  %v814 = vadd.f32 0.0, %v813
  %v815 = vpop.f32.mrf.mxu0
  %816 = vdwg.mxu0
  %v817 = vadd.f32 %v785, %v801
  %v818 = vadd.f32 %v786, %v814
  %v819 = vmul.f32 %v817, 0.5
  %v820 = vmul.f32 %v818, 0.5
  %v821 = vtanh.pop %v819
  %v822 = vtanh.pop %v820
  %v823 = vmul.f32 %v821, 0.5
  %v824 = vmul.f32 %v822, 0.5
  %v825 = vadd.f32 %v823, 0.5
  %v826 = vadd.f32 %v824, 0.5
  %v827 = vtanh.pop %v818
  %829 = vrot.lane.b32.xlu0 %v779, 64
  %v830 = vpop.permute.xlu0 %829
  %v832 = vmul.f32 %v825, %v830
  %834 = vrot.lane.b32.xlu0 %v827, 64
  %v835 = vpop.permute.xlu0 %834
  %v837 = vmul.f32 %v825, %v835
  %839 = vrot.lane.b32.xlu0 %v837, 64
  %v840 = vpop.permute.xlu0 %839
  %v842 = vadd.f32 %v832, %v840
  %v843 = vtanh.pop %v842
  %845 = vrot.lane.b32.xlu0 %v843, 64
  %v846 = vpop.permute.xlu0 %845
  %v848 = vmul.f32 %v826, %v846
  %vm849 = vcmp.le.s32.totalorder %v214, 7
  %v850 = vsel %vm849, %v848, %v774
  %vm851 = vcmp.eq.s32.totalorder %v213, 7
  %v852 = vsel %vm851, %v850, %v781
  %v853 = vpack.c.bf16 %v852, %v852
  %v854 = vld [vmem:[%s5] sm:$0xf]
  %v855 = vld [vmem:[%s5 + $0x4] sm:$0xf]
  %v856 = vld [vmem:[%s5 + $0x8] sm:$0xf]
  %v857 = vld [vmem:[%s5 + $0xc] sm:$0xf]
  %v858 = vld [vmem:[%s5 + $0x10] sm:$0xf]
  %v859 = vld [vmem:[%s5 + $0x14] sm:$0xf]
  %v860 = vld [vmem:[%s5 + $0x18] sm:$0xf]
  %v861 = vld [vmem:[%s5 + $0x1c] sm:$0xf]
  %v862 = vld [vmem:[%s6] sm:$0x1]
  %v864 = vperm.slane %v862, 0
  %v874 = vunpack.c.l.b16 %v854
  %v875 = vunpack.c.l.b16 %v855
  %v876 = vunpack.c.l.b16 %v856
  %v877 = vunpack.c.l.b16 %v857
  %v878 = vunpack.c.l.b16 %v858
  %v879 = vunpack.c.l.b16 %v859
  %v880 = vunpack.c.l.b16 %v860
  %v881 = vunpack.c.l.b16 %v861
  %v882 = vpack.c.b16 %v875, %v874
  %v883 = vpack.c.b16 %v877, %v876
  %v884 = vpack.c.b16 %v879, %v878
  %v885 = vpack.c.b16 %v881, %v880
  %v891 = vsel %vm109, %v853, 0
  %893 = vmatpush.bf16.msra.mxu0 0
  %894 = vmatpush.bf16.msra.mxu0 0
  %895 = vmatpush.bf16.msra.mxu0 0
  %896 = vmatpush.bf16.msra.mxu0 0
  %897 = vmatpush.bf16.msra.mxu0 %v885
  %898 = vmatpush.bf16.msra.mxu0 %v884
  %899 = vmatpush.bf16.msra.mxu0 %v883
  %900 = vmatpush.bf16.msra.mxu0 %v882
  %901 = vmatmul.bf16.gmra.mxu0 %v891
  %v902 = vpop.f32.mrf.mxu0
  %v903 = vadd.f32 %v864, %v902
  %v904 = vpop.f32.mrf.mxu0
  %905 = vdwg.mxu0
  %906 = vmax.xlane.f32.xlu0 %v903
  %v907 = vpop.xlane.xlu0 %906
  %v908 = vsub.f32 %v903, %v907
  %v909 = vmul.f32 %v908, 1.442695
  %v910 = vpow.pop %v909
  %911 = vadd.xlane.f32.xlu0 %v910
  %v912 = vpop.xlane.xlu0 %911
  %v913 = vlog2.pop %v912
  %v914 = vmul.f32 %v913, 0.6931472
  %v915 = vadd.f32 %v907, %v914
  %v916 = vsub.f32 %v903, %v915
  %917 = vst [vmem:[%s7] sm:$0xff] %v916
  // Predicated region
  $region30: #{lstm_sentiment_forward.1} parent=0 // pred_check
    _
  $region31: #{lstm_sentiment_forward.1} parent=0 // pred_check_branch
    %919 = sbr.rel (0) target = $region33
  $region32: #{lstm_sentiment_forward.1} parent=0 // pred_region
    _
  $region33: #{lstm_sentiment_forward.1} parent=0 // pred_fallthru
    _
  // Predicated region
  $region34: #{lstm_sentiment_forward.1} parent=0 // pred_check
    _
  $region35: #{lstm_sentiment_forward.1} parent=0 // pred_check_branch
    %921 = sbr.rel (0) target = $region37
  $region36: #{lstm_sentiment_forward.1} parent=0 // pred_region
    _
  $region37: #{lstm_sentiment_forward.1} parent=0 // pred_fallthru
    _

</llo_original>
